<compile_context>
chip_gen: v5e
topology: v5e:2x2
jax: 0.10.0
libtpu: 0.0.40
codegen_flags: <defaults>
</compile_context>

<pallas_src>
import functools

import jax
import jax.numpy as jnp
from jax.experimental import pallas as pl
from jax.experimental.pallas import tpu as pltpu


def attention_kernel(x_ref, wqkv_ref, wp_ref, bias_ref, o_ref, acc_ref, *, head_dim):
    """Grid step = (batch block b, head h).

    x_ref    : (TB, N, C)      f32   (same block for every h -> DMA'd once per b)
    wqkv_ref : (1, C, 3*hd)    bf16  (fused [q|k|v] slab for head h; scale in q)
    wp_ref   : (1, hd, C)      bf16  (output-projection rows for head h)
    bias_ref : (1, 1, C)       f32
    o_ref    : (TB, N, C)      x.dtype
    acc_ref  : (TB, N, C)      f32 VMEM scratch (accumulates across the head axis)
    """
    hd = head_dim
    h = pl.program_id(1)

    @pl.when(h == 0)
    def _init():
        acc_ref[...] = jnp.zeros_like(acc_ref)

    # Cast the f32 tile to bf16 in VMEM; the VPU cast hides under the MXU work.
    x = x_ref[...].astype(jnp.bfloat16)                       # (TB, N, C)

    # Fused per-head QKV projection on the MXU, f32 accumulation.
    qkv = jnp.einsum('bnc,cd->bnd', x, wqkv_ref[0],
                     preferred_element_type=jnp.float32)      # (TB, N, 3*hd)
    q = qkv[..., 0 * hd:1 * hd].astype(jnp.bfloat16)          # scale already folded
    k = qkv[..., 1 * hd:2 * hd].astype(jnp.bfloat16)
    v = qkv[..., 2 * hd:3 * hd].astype(jnp.bfloat16)

    # Scores in f32, numerically-stable softmax numerator.
    s = jnp.einsum('bqd,bkd->bqk', q, k,
                   preferred_element_type=jnp.float32)        # (TB, N, N)
    s = s - jnp.max(s, axis=-1, keepdims=True)
    p = jnp.exp(s)
    l = jnp.sum(p, axis=-1, keepdims=True)                    # (TB, N, 1)

    # Un-normalized context, then row-scale by 1/l on the (N, hd) context instead
    # of scaling the (N, N) probability matrix.  Exact reciprocal (tiny cost here).
    o = jnp.einsum('bqk,bkd->bqd', p.astype(jnp.bfloat16), v,
                   preferred_element_type=jnp.float32)        # (TB, N, hd)
    o = o * pl.reciprocal(l)

    # Fold the head-concat into the output projection: accumulate the per-head
    # partial projection into a lane-dense (TB, N, C) f32 tile.
    acc_ref[...] += jnp.einsum('bnd,dc->bnc', o.astype(jnp.bfloat16), wp_ref[0],
                               preferred_element_type=jnp.float32)

    @pl.when(h == pl.num_programs(1) - 1)
    def _finalize():
        o_ref[...] = (acc_ref[...] + bias_ref[...]).astype(o_ref.dtype)


def attention_forward(x, w_qkv, w_proj, b_proj, num_heads, *, batch_block=1):
    B, N, C = x.shape
    H = num_heads
    assert C % H == 0, "dim must be divisible by num_heads"
    hd = C // H
    scale = float(hd) ** -0.5
    TB = batch_block
    assert B % TB == 0, "batch must be divisible by batch_block"

    # ----------------- host-side weight prep (free, outside the kernel) ---------
    # qkv Linear output rows are laid out as [3, H, hd] (PyTorch reshape/permute).
    def per_head_t(w):                       # (C_out=C, C_in=C) -> (H, C_in, hd)
        return jnp.transpose(w.reshape(H, hd, C), (0, 2, 1))

    wq_t = per_head_t(w_qkv[0 * C:1 * C] * scale)   # fold softmax scale into Wq
    wk_t = per_head_t(w_qkv[1 * C:2 * C])
    wv_t = per_head_t(w_qkv[2 * C:3 * C])
    # Fused per-head [q | k | v] slab -> one (C, 3*hd) matmul per head per step.
    wqkv_t = jnp.concatenate([wq_t, wk_t, wv_t], axis=-1).astype(jnp.bfloat16)

    # Output projection: attn-out columns are head-major (h*hd + d), so split
    # W_proj.T (C_in, C_out) row-wise per head -> (H, hd, C).
    wp_t = w_proj.T.reshape(H, hd, C).astype(jnp.bfloat16)
    bias = b_proj.reshape(1, 1, C).astype(jnp.float32)

    kernel = functools.partial(attention_kernel, head_dim=hd)

    return pl.pallas_call(
        kernel,
        out_shape=jax.ShapeDtypeStruct((B, N, C), x.dtype),
        grid_spec=pltpu.PrefetchScalarGridSpec(
            num_scalar_prefetch=0,
            grid=(B // TB, H),               # heads last = reduction axis
            in_specs=[
                pl.BlockSpec((TB, N, C), lambda b, h: (b, 0, 0)),       # x (f32)
                pl.BlockSpec((1, C, 3 * hd), lambda b, h: (h, 0, 0)),   # fused qkv W
                pl.BlockSpec((1, hd, C), lambda b, h: (h, 0, 0)),       # proj W slab
                pl.BlockSpec((1, 1, C), lambda b, h: (0, 0, 0)),        # proj bias
            ],
            out_specs=pl.BlockSpec((TB, N, C), lambda b, h: (b, 0, 0)),
            scratch_shapes=[pltpu.VMEM((TB, N, C), jnp.float32)],
        ),
        compiler_params=pltpu.CompilerParams(
            dimension_semantics=("parallel", "arbitrary"),
            vmem_limit_bytes=48 * 1024 * 1024,
        ),
    )(x, wqkv_t, wp_t, bias)


def attention_reference(x, w_qkv, w_proj, b_proj, num_heads):
    """Pure-JAX f32 reference mirroring the PyTorch forward exactly."""
    B, N, C = x.shape
    hd = C // num_heads
    scale = float(hd) ** -0.5
    qkv = jnp.einsum('bnc,oc->bno', x, w_qkv)                 # (B, N, 3C)
    qkv = qkv.reshape(B, N, 3, num_heads, hd).transpose(2, 0, 3, 1, 4)
    q, k, v = qkv[0], qkv[1], qkv[2]                          # (B, H, N, hd)
    attn = jnp.einsum('bhnd,bhmd->bhnm', q, k) * scale
    attn = jax.nn.softmax(attn, axis=-1)
    out = jnp.einsum('bhnm,bhmd->bhnd', attn, v)              # (B, H, N, hd)
    out = out.transpose(0, 2, 1, 3).reshape(B, N, C)
    return jnp.einsum('bnc,oc->bno', out, w_proj) + b_proj


if __name__ == "__main__":
    B, N, C, num_heads = 2, 8, 32, 4

    key = jax.random.PRNGKey(0)
    kx, kqkv, kproj, kb = jax.random.split(key, 4)

    x = jax.random.normal(kx, (B, N, C), dtype=jnp.float32)
    # nn.Linear(dim, 3*dim, bias=False): weight (3C, C)
    w_qkv = 0.02 * jax.random.normal(kqkv, (3 * C, C), dtype=jnp.float32)
    # nn.Linear(dim, dim): weight (C, C), bias (C,)
    w_proj = 0.02 * jax.random.normal(kproj, (C, C), dtype=jnp.float32)
    b_proj = 0.02 * jax.random.normal(kb, (C,), dtype=jnp.float32)

    out = attention_forward(x, w_qkv, w_proj, b_proj, num_heads)
    out = jax.block_until_ready(out)

    ref = attention_reference(x, w_qkv, w_proj, b_proj, num_heads)
    assert out.shape == (B, N, C)
    # bf16 matmul operands with f32 accumulation -> loosened tolerance.
    assert jnp.allclose(out, ref, atol=5e-3, rtol=5e-2), (
        f"mismatch vs reference: max abs err {jnp.max(jnp.abs(out - ref))}")

    print("KERNEL_OK")
</pallas_src>

<mosaic_0001>
module attributes {stable_mosaic.version = 11 : i64} {
  func.func @attention_kernel(%arg0: i32, %arg1: i32, %arg2: memref<1x8x32xf32, #tpu.memory_space<vmem>>, %arg3: memref<1x32x24xbf16, #tpu.memory_space<vmem>>, %arg4: memref<1x8x32xbf16, #tpu.memory_space<vmem>>, %arg5: memref<1x1x32xf32, #tpu.memory_space<vmem>>, %arg6: memref<1x8x32xf32, #tpu.memory_space<vmem>>, %arg7: memref<1x8x32xf32, #tpu.memory_space<vmem>>) attributes {dimension_semantics = [#tpu.dimension_semantics<parallel>, #tpu.dimension_semantics<arbitrary>], iteration_bounds = array<i64: 2, 4>, scalar_prefetch = 0 : i64, scratch_operands = 1 : i64, tpu.core_type = #tpu.core_type<tc>, window_params = [{transform_indices = @transform_0, window_bounds = array<i64: 1, 8, 32>}, {transform_indices = @transform_1, window_bounds = array<i64: 1, 32, 24>}, {transform_indices = @transform_2, window_bounds = array<i64: 1, 8, 32>}, {pipeline_mode = #tpu.pipeline_mode<synchronous>, transform_indices = @transform_3, window_bounds = array<i64: 1, 1, 32>}, {transform_indices = @transform_4, window_bounds = array<i64: 1, 8, 32>}]} {
    %c0_i32 = arith.constant 0 : i32
    %0 = arith.cmpi eq, %arg1, %c0_i32 : i32
    %1 = arith.extui %0 : i1 to i32
    %c0_i32_0 = arith.constant 0 : i32
    %2 = arith.cmpi ne, %1, %c0_i32_0 : i32
    scf.if %2 {
      %cst_21 = arith.constant 0.000000e+00 : f32
      %37 = vector.broadcast %cst_21 : f32 to vector<1x8x32xf32>
      %c0_22 = arith.constant 0 : index
      %c0_23 = arith.constant 0 : index
      %c0_24 = arith.constant 0 : index
      %38 = vector.load %arg7[%c0_22, %c0_23, %c0_24] : memref<1x8x32xf32, #tpu.memory_space<vmem>>, vector<1x8x32xf32>
      tpu.vector_store %arg7[%c0_22, %c0_23, %c0_24], %37 {strides = array<i32>} : memref<1x8x32xf32, #tpu.memory_space<vmem>>, vector<1x8x32xf32>,
    } else {
    }
    %c0 = arith.constant 0 : index
    %c0_1 = arith.constant 0 : index
    %c0_2 = arith.constant 0 : index
    %3 = vector.load %arg2[%c0, %c0_1, %c0_2] : memref<1x8x32xf32, #tpu.memory_space<vmem>>, vector<1x8x32xf32>
    %4 = arith.truncf %3 : vector<1x8x32xf32> to vector<1x8x32xbf16>
    %c0_3 = arith.constant 0 : index
    %c0_4 = arith.constant 0 : index
    %c0_5 = arith.constant 0 : index
    %5 = vector.load %arg3[%c0_3, %c0_4, %c0_5] : memref<1x32x24xbf16, #tpu.memory_space<vmem>>, vector<1x32x24xbf16>
    %6 = vector.shape_cast %5 : vector<1x32x24xbf16> to vector<32x24xbf16>
    "tpu.trace_start"() <{level = 10 : i32, message = "bnc,cd->bnd"}> : () -> ()
    %cst = arith.constant dense<0.000000e+00> : vector<1x8x24xf32>
    %7 = tpu.matmul %4, %6, %cst {dimension_numbers = #tpu.dot_dimension_numbers<[2], [0], [0, 1], [1], [0, 0, 0, 1, 1, 1], [], []>} : vector<1x8x32xbf16>, vector<32x24xbf16>, vector<1x8x24xf32> -> vector<1x8x24xf32>
    "tpu.trace_stop"() : () -> ()
    %8 = vector.extract_strided_slice %7 {offsets = [0, 0, 0], sizes = [1, 8, 8], strides = [1, 1, 1]} : vector<1x8x24xf32> to vector<1x8x8xf32>
    %9 = arith.truncf %8 : vector<1x8x8xf32> to vector<1x8x8xbf16>
    %10 = vector.extract_strided_slice %7 {offsets = [0, 0, 8], sizes = [1, 8, 8], strides = [1, 1, 1]} : vector<1x8x24xf32> to vector<1x8x8xf32>
    %11 = arith.truncf %10 : vector<1x8x8xf32> to vector<1x8x8xbf16>
    %12 = vector.extract_strided_slice %7 {offsets = [0, 0, 16], sizes = [1, 8, 8], strides = [1, 1, 1]} : vector<1x8x24xf32> to vector<1x8x8xf32>
    %13 = arith.truncf %12 : vector<1x8x8xf32> to vector<1x8x8xbf16>
    "tpu.trace_start"() <{level = 10 : i32, message = "bqd,bkd->bqk"}> : () -> ()
    %cst_6 = arith.constant dense<0.000000e+00> : vector<1x8x8xf32>
    %14 = tpu.matmul %9, %11, %cst_6 {dimension_numbers = #tpu.dot_dimension_numbers<[2], [2], [1], [1], [0, 0, 0, 1, 1, 1], [0], [0]>} : vector<1x8x8xbf16>, vector<1x8x8xbf16>, vector<1x8x8xf32> -> vector<1x8x8xf32>
    "tpu.trace_stop"() : () -> ()
    %cst_7 = arith.constant dense<0xFF800000> : vector<1x8xf32>
    %15 = vector.multi_reduction <maximumf>, %14, %cst_7 [2] : vector<1x8x8xf32> to vector<1x8xf32>
    %16 = vector.shape_cast %15 : vector<1x8xf32> to vector<1x8x1xf32>
    %17 = vector.broadcast %16 : vector<1x8x1xf32> to vector<1x8x8xf32>
    %18 = arith.subf %14, %17 : vector<1x8x8xf32>
    %19 = math.exp %18 : vector<1x8x8xf32>
    %cst_8 = arith.constant dense<0.000000e+00> : vector<1x8xf32>
    %20 = vector.multi_reduction <add>, %19, %cst_8 [2] : vector<1x8x8xf32> to vector<1x8xf32>
    %21 = vector.shape_cast %20 : vector<1x8xf32> to vector<1x8x1xf32>
    %22 = arith.truncf %19 : vector<1x8x8xf32> to vector<1x8x8xbf16>
    "tpu.trace_start"() <{level = 10 : i32, message = "bqk,bkd->bqd"}> : () -> ()
    %cst_9 = arith.constant dense<0.000000e+00> : vector<1x8x8xf32>
    %23 = tpu.matmul %22, %13, %cst_9 {dimension_numbers = #tpu.dot_dimension_numbers<[2], [1], [1], [2], [0, 0, 0, 1, 1, 2], [0], [0]>} : vector<1x8x8xbf16>, vector<1x8x8xbf16>, vector<1x8x8xf32> -> vector<1x8x8xf32>
    "tpu.trace_stop"() : () -> ()
    %24 = tpu.reciprocal %21 : vector<1x8x1xf32> -> vector<1x8x1xf32>
    %25 = vector.broadcast %24 : vector<1x8x1xf32> to vector<1x8x8xf32>
    %26 = arith.mulf %23, %25 : vector<1x8x8xf32>
    %c0_10 = arith.constant 0 : index
    %c0_11 = arith.constant 0 : index
    %c0_12 = arith.constant 0 : index
    %27 = vector.load %arg7[%c0_10, %c0_11, %c0_12] : memref<1x8x32xf32, #tpu.memory_space<vmem>>, vector<1x8x32xf32>
    %28 = arith.truncf %26 : vector<1x8x8xf32> to vector<1x8x8xbf16>
    %c0_13 = arith.constant 0 : index
    %c0_14 = arith.constant 0 : index
    %c0_15 = arith.constant 0 : index
    %29 = vector.load %arg4[%c0_13, %c0_14, %c0_15] : memref<1x8x32xbf16, #tpu.memory_space<vmem>>, vector<1x8x32xbf16>
    %30 = vector.shape_cast %29 : vector<1x8x32xbf16> to vector<8x32xbf16>
    "tpu.trace_start"() <{level = 10 : i32, message = "bnd,dc->bnc"}> : () -> ()
    %cst_16 = arith.constant dense<0.000000e+00> : vector<1x8x32xf32>
    %31 = tpu.matmul %28, %30, %cst_16 {dimension_numbers = #tpu.dot_dimension_numbers<[2], [0], [0, 1], [1], [0, 0, 0, 1, 1, 1], [], []>} : vector<1x8x8xbf16>, vector<8x32xbf16>, vector<1x8x32xf32> -> vector<1x8x32xf32>
    "tpu.trace_stop"() : () -> ()
    %32 = arith.addf %27, %31 : vector<1x8x32xf32>
    %c0_17 = arith.constant 0 : index
    %c0_18 = arith.constant 0 : index
    %c0_19 = arith.constant 0 : index
    %33 = vector.load %arg7[%c0_17, %c0_18, %c0_19] : memref<1x8x32xf32, #tpu.memory_space<vmem>>, vector<1x8x32xf32>
    tpu.vector_store %arg7[%c0_17, %c0_18, %c0_19], %32 {strides = array<i32>} : memref<1x8x32xf32, #tpu.memory_space<vmem>>, vector<1x8x32xf32>,
    %c3_i32 = arith.constant 3 : i32
    %34 = arith.cmpi eq, %arg1, %c3_i32 : i32
    %35 = arith.extui %34 : i1 to i32
    %c0_i32_20 = arith.constant 0 : i32
    %36 = arith.cmpi ne, %35, %c0_i32_20 : i32
    scf.if %36 {
      %c0_21 = arith.constant 0 : index
      %c0_22 = arith.constant 0 : index
      %c0_23 = arith.constant 0 : index
      %37 = vector.load %arg7[%c0_21, %c0_22, %c0_23] : memref<1x8x32xf32, #tpu.memory_space<vmem>>, vector<1x8x32xf32>
      %c0_24 = arith.constant 0 : index
      %c0_25 = arith.constant 0 : index
      %c0_26 = arith.constant 0 : index
      %38 = vector.load %arg5[%c0_24, %c0_25, %c0_26] : memref<1x1x32xf32, #tpu.memory_space<vmem>>, vector<1x1x32xf32>
      %39 = vector.broadcast %38 : vector<1x1x32xf32> to vector<1x8x32xf32>
      %40 = arith.addf %37, %39 : vector<1x8x32xf32>
      %c0_27 = arith.constant 0 : index
      %c0_28 = arith.constant 0 : index
      %c0_29 = arith.constant 0 : index
      %41 = vector.load %arg6[%c0_27, %c0_28, %c0_29] : memref<1x8x32xf32, #tpu.memory_space<vmem>>, vector<1x8x32xf32>
      tpu.vector_store %arg6[%c0_27, %c0_28, %c0_29], %40 {strides = array<i32>} : memref<1x8x32xf32, #tpu.memory_space<vmem>>, vector<1x8x32xf32>,
    } else {
    }
    return
  }
  func.func @transform_0(%arg0: i32, %arg1: i32) -> (i32, i32, i32) {
    %c0_i32 = arith.constant 0 : i32
    %c0_i32_0 = arith.constant 0 : i32
    %c0_i32_1 = arith.constant 0 : i32
    return %arg0, %c0_i32, %c0_i32_0 : i32, i32, i32
  }
  func.func @transform_1(%arg0: i32, %arg1: i32) -> (i32, i32, i32) {
    %c0_i32 = arith.constant 0 : i32
    %c0_i32_0 = arith.constant 0 : i32
    %c0_i32_1 = arith.constant 0 : i32
    return %arg1, %c0_i32, %c0_i32_0 : i32, i32, i32
  }
  func.func @transform_2(%arg0: i32, %arg1: i32) -> (i32, i32, i32) {
    %c0_i32 = arith.constant 0 : i32
    %c0_i32_0 = arith.constant 0 : i32
    %c0_i32_1 = arith.constant 0 : i32
    return %arg1, %c0_i32, %c0_i32_0 : i32, i32, i32
  }
  func.func @transform_3(%arg0: i32, %arg1: i32) -> (i32, i32, i32) {
    %c0_i32 = arith.constant 0 : i32
    %c0_i32_0 = arith.constant 0 : i32
    %c0_i32_1 = arith.constant 0 : i32
    %c0_i32_2 = arith.constant 0 : i32
    return %c0_i32, %c0_i32_0, %c0_i32_1 : i32, i32, i32
  }
  func.func @transform_4(%arg0: i32, %arg1: i32) -> (i32, i32, i32) {
    %c0_i32 = arith.constant 0 : i32
    %c0_i32_0 = arith.constant 0 : i32
    %c0_i32_1 = arith.constant 0 : i32
    return %arg0, %c0_i32, %c0_i32_0 : i32, i32, i32
  }
}

</mosaic_0001>

<llo_original>
// kernel: tpu_custom_call.1
$region0: #{tpu_custom_call.1}
  #allocation0 [shape = 'u32[]', space=smem, size = 0x4, offset = 0x4, fixed_abs, tag = 'smem constant byte address 0x4 - core index']
  #allocation1 [shape = 'u32[72,128]{1,0:T(1,128)}', space=vmem, size = 0x9000, scoped, tag = 'internal scratch']
  #allocation2 [shape = 'f32[1,8,32]{2,1,0:T(8,128)}', space=vmem, size = 0x1000, scoped, tag = 'scratch operand']
  %s0 = inlined_call_operand.vmem [shape: f32[2,8,32], index: 0, kind: input, shape index: {}]
  %s1 = inlined_call_operand.vmem [shape: bf16[4,32,24], index: 1, kind: input, shape index: {}]
  %s2 = inlined_call_operand.vmem [shape: bf16[4,8,32], index: 2, kind: input, shape index: {}]
  %s3 = inlined_call_operand.vmem [shape: f32[1,1,32], index: 3, kind: input, shape index: {}]
  %s4 = inlined_call_operand.hbm [shape: f32[2,8,32], index: 4, kind: output, shape index: {}]
  %s5 = sld [smem:[#allocation0]]
  $region57: #{tpu_custom_call.1} parent=0
    _
  %s7 = ssub.s32 1, %s5
  %s8 = scalar_select 0, %s7, %s5
  $region1: #{tpu_custom_call.1} parent=0
    #allocation3 [shape = 'u8[8192]{0}', space=vmem, size = 0x2000, scoped, tag = 'output window, operand 0']
    #allocation4 [shape = 's32[2]{0}', space=sflag, size = 0x8, scoped, tag = 'scoped memory for tpu_custom_call.1']
    %9 = vsyncpa [#allocation4], 0
    %s10 = scalar_lea.sflag [#allocation4], 1
    %11 = vsyncpa %s10, 0
    loop: start=0, step=1, limit=10
    $region2: #{tpu_custom_call.1} parent=1 // loop_pre_header
      _
    $region3: #{tpu_custom_call.1} parent=1 // loop_header
      %s13 = sphi 0, %s17
      %p14 = scmp.ge.s32.totalorder %s13, 10
      %s20 = sphi 0, %s32
      %s21 = sphi 0, %s28
      %s22 = sphi 0, %s20
      %s23 = sphi 0, %s21
      %s24 = sphi 0, %s22
      %s25 = sphi 0, %s23
      %s35 = sphi 0, %s37
      %s38 = sphi 0, %s35
      %s39 = sphi 0, %s38
      %s55 = sphi 0, %s39
      %s61 = sphi 0, %s63
      %s64 = sphi 0, %s61
      %s65 = sphi 0, %s64
      %s81 = sphi 0, %s65
      %s87 = sphi 0, %s89
      %s90 = sphi 0, %s87
      %s91 = sphi 0, %s90
      %s107 = sphi 0, %s91
      %s111 = sphi 0, %s111
      %s113 = sphi 0, %s111
      %s114 = sphi 0, %s113
      %s128 = sphi 0, %s114
      %s134 = sphi 0, %s136
      %s137 = sphi 0, %s134
      %s138 = sphi 0, %s137
      %s154 = sphi 0, %s138
    $region4: #{tpu_custom_call.1} parent=1 // loop_header_branch
      %16 = sbr.rel (%p14) target = $region8
    $region5: #{tpu_custom_call.1} parent=1 // loop_body
      %s18 = ssub.s32 %s13, 1
      %s19 = ssub.s32 %s13, 2
      %s26 = sadd.s32 1, %s21
      %p27 = scmp.ge.s32.totalorder %s26, 4
      %s28 = scalar_select %p27, 0, %s26
      %s29 = sadd.s32 1, %s20
      %s30 = scalar_select %p27, %s29, %s20
      %p31 = scmp.ge.s32.totalorder %s30, 2
      %s32 = scalar_select %p31, 0, %s30
      %s33 = ssub.s32 %s20, %s32
      %p34 = scmp.eq.s32.totalorder %s33, 0
      %s36 = sadd.s32 %s35, 1
      %s37 = scalar_select %p34, %s35, %s36
      %p40 = pneg %p34
      %p41 = scmp.eq.s32.totalorder %s13, 7
      %p42 = por %p40, %p41
      %p43 = scmp.ne.s32.totalorder %s35, %s38
      %p44 = scmp.eq.s32.totalorder %s13, 0
      %p45 = por %p43, %p44
      %p46 = scmp.ne.s32.totalorder %s35, %s38
      %p47 = scmp.eq.s32.totalorder %s18, 7
      %p48 = por %p46, %p47
      %p49 = scmp.ne.s32.totalorder %s38, %s39
      %p50 = scmp.eq.s32.totalorder %s18, 0
      %p51 = por %p49, %p50
      %p52 = scmp.ne.s32.totalorder %s38, %s39
      %p53 = scmp.eq.s32.totalorder %s19, 7
      %p54 = por %p52, %p53
      %p56 = scmp.ne.s32.totalorder %s39, %s55
      %p57 = scmp.eq.s32.totalorder %s19, 0
      %p58 = por %p56, %p57
      %s59 = ssub.s32 %s21, %s28
      %p60 = scmp.eq.s32.totalorder %s59, 0
      %s62 = sadd.s32 %s61, 1
      %s63 = scalar_select %p60, %s61, %s62
      %p66 = pneg %p60
      %p67 = scmp.eq.s32.totalorder %s13, 7
      %p68 = por %p66, %p67
      %p69 = scmp.ne.s32.totalorder %s61, %s64
      %p70 = scmp.eq.s32.totalorder %s13, 0
      %p71 = por %p69, %p70
      %p72 = scmp.ne.s32.totalorder %s61, %s64
      %p73 = scmp.eq.s32.totalorder %s18, 7
      %p74 = por %p72, %p73
      %p75 = scmp.ne.s32.totalorder %s64, %s65
      %p76 = scmp.eq.s32.totalorder %s18, 0
      %p77 = por %p75, %p76
      %p78 = scmp.ne.s32.totalorder %s64, %s65
      %p79 = scmp.eq.s32.totalorder %s19, 7
      %p80 = por %p78, %p79
      %p82 = scmp.ne.s32.totalorder %s65, %s81
      %p83 = scmp.eq.s32.totalorder %s19, 0
      %p84 = por %p82, %p83
      %s85 = ssub.s32 %s21, %s28
      %p86 = scmp.eq.s32.totalorder %s85, 0
      %s88 = sadd.s32 %s87, 1
      %s89 = scalar_select %p86, %s87, %s88
      %p92 = pneg %p86
      %p93 = scmp.eq.s32.totalorder %s13, 7
      %p94 = por %p92, %p93
      %p95 = scmp.ne.s32.totalorder %s87, %s90
      %p96 = scmp.eq.s32.totalorder %s13, 0
      %p97 = por %p95, %p96
      %p98 = scmp.ne.s32.totalorder %s87, %s90
      %p99 = scmp.eq.s32.totalorder %s18, 7
      %p100 = por %p98, %p99
      %p101 = scmp.ne.s32.totalorder %s90, %s91
      %p102 = scmp.eq.s32.totalorder %s18, 0
      %p103 = por %p101, %p102
      %p104 = scmp.ne.s32.totalorder %s90, %s91
      %p105 = scmp.eq.s32.totalorder %s19, 7
      %p106 = por %p104, %p105
      %p108 = scmp.ne.s32.totalorder %s91, %s107
      %p109 = scmp.eq.s32.totalorder %s19, 0
      %p110 = por %p108, %p109
      %s112 = sadd.s32 %s111, 1
      %p115 = scmp.eq.s32.totalorder %s13, 7
      %p116 = scmp.ne.s32.totalorder %s111, %s113
      %p117 = scmp.eq.s32.totalorder %s13, 0
      %p118 = por %p116, %p117
      %p119 = scmp.ne.s32.totalorder %s111, %s113
      %p120 = scmp.eq.s32.totalorder %s18, 7
      %p121 = por %p119, %p120
      %p122 = scmp.ne.s32.totalorder %s113, %s114
      %p123 = scmp.eq.s32.totalorder %s18, 0
      %p124 = por %p122, %p123
      %p125 = scmp.ne.s32.totalorder %s113, %s114
      %p126 = scmp.eq.s32.totalorder %s19, 7
      %p127 = por %p125, %p126
      %p129 = scmp.ne.s32.totalorder %s114, %s128
      %p130 = scmp.eq.s32.totalorder %s19, 0
      %p131 = por %p129, %p130
      %s132 = ssub.s32 %s20, %s32
      %p133 = scmp.eq.s32.totalorder %s132, 0
      %s135 = sadd.s32 %s134, 1
      %s136 = scalar_select %p133, %s134, %s135
      %p139 = pneg %p133
      %p140 = scmp.eq.s32.totalorder %s13, 7
      %p141 = por %p139, %p140
      %p142 = scmp.ne.s32.totalorder %s134, %s137
      %p143 = scmp.eq.s32.totalorder %s13, 0
      %p144 = por %p142, %p143
      %p145 = scmp.ne.s32.totalorder %s134, %s137
      %p146 = scmp.eq.s32.totalorder %s18, 7
      %p147 = por %p145, %p146
      %p148 = scmp.ne.s32.totalorder %s137, %s138
      %p149 = scmp.eq.s32.totalorder %s18, 0
      %p150 = por %p148, %p149
      %p151 = scmp.ne.s32.totalorder %s137, %s138
      %p152 = scmp.eq.s32.totalorder %s19, 7
      %p153 = por %p151, %p152
      %p155 = scmp.ne.s32.totalorder %s138, %s154
      %p156 = scmp.eq.s32.totalorder %s19, 0
      %p157 = por %p155, %p156
      %p158 = scmp.le.s32.totalorder 1, %s13
      %p159 = scmp.lt.s32.totalorder %s13, 9
      %p160 = pnand %p158, %p159
      %p161 = pneg %p160
      // Predicated region
      $region9: #{tpu_custom_call.1} parent=5 // pred_check
        _
      $region10: #{tpu_custom_call.1} parent=5 // pred_check_branch
        %163 = sbr.rel (%p160) target = $region12
      $region11: #{tpu_custom_call.1} parent=5 // pred_region
        %s164 = ssub.s32 %s13, 1
        // Predicated region
        $region13: #{tpu_custom_call.1} parent=11 // pred_check
          %p165 = pneg %p124
        $region14: #{tpu_custom_call.1} parent=11 // pred_check_branch
          %167 = sbr.rel (%p165) target = $region16
        $region15: #{tpu_custom_call.1} parent=11 // pred_region
          _
        $region16: #{tpu_custom_call.1} parent=11 // pred_fallthru
          _
      $region12: #{tpu_custom_call.1} parent=5 // pred_fallthru
        _
      %p168 = scmp.lt.s32.totalorder %s13, 8
      // Predicated region
      $region17: #{tpu_custom_call.1} parent=5 // pred_check
        %p169 = pneg %p168
      $region18: #{tpu_custom_call.1} parent=5 // pred_check_branch
        %171 = sbr.rel (%p169) target = $region20
      $region19: #{tpu_custom_call.1} parent=5 // pred_region
        // Predicated region
        $region21: #{tpu_custom_call.1} parent=19 // pred_check
          %p172 = pneg %p45
        $region22: #{tpu_custom_call.1} parent=19 // pred_check_branch
          %174 = sbr.rel (%p172) target = $region24
        $region23: #{tpu_custom_call.1} parent=19 // pred_region
          %p175 = scmp.lt.s32.totalorder %s20, 1
          %s176 = scalar_select %p175, %s20, 1
          %s177 = smul.addr %s176, 8
          %s178 = scalar_lea.vmem %s0, %s177
        $region24: #{tpu_custom_call.1} parent=19 // pred_fallthru
          _
        // Predicated region
        $region25: #{tpu_custom_call.1} parent=19 // pred_check
          %p179 = pneg %p71
        $region26: #{tpu_custom_call.1} parent=19 // pred_check_branch
          %181 = sbr.rel (%p179) target = $region28
        $region27: #{tpu_custom_call.1} parent=19 // pred_region
          %p182 = scmp.lt.s32.totalorder %s21, 3
          %s183 = scalar_select %p182, %s21, 3
          %s184 = smul.addr %s183, 4
          %s185 = smul.addr %s184, 4
          %s186 = scalar_lea.vmem %s1, %s185
        $region28: #{tpu_custom_call.1} parent=19 // pred_fallthru
          _
        // Predicated region
        $region29: #{tpu_custom_call.1} parent=19 // pred_check
          %p187 = pneg %p97
        $region30: #{tpu_custom_call.1} parent=19 // pred_check_branch
          %189 = sbr.rel (%p187) target = $region32
        $region31: #{tpu_custom_call.1} parent=19 // pred_region
          %p190 = scmp.lt.s32.totalorder %s21, 3
          %s191 = scalar_select %p190, %s21, 3
          %s192 = smul.addr %s191, 4
          %s193 = scalar_lea.vmem %s2, %s192
        $region32: #{tpu_custom_call.1} parent=19 // pred_fallthru
          _
      $region20: #{tpu_custom_call.1} parent=5 // pred_fallthru
        _
      %p194 = scmp.le.s32.totalorder 1, %s13
      %p195 = scmp.lt.s32.totalorder %s13, 9
      %p196 = pnand %p194, %p195
      %p197 = pneg %p196
      // Predicated region
      $region33: #{tpu_custom_call.1} parent=5 // pred_check
        _
      $region34: #{tpu_custom_call.1} parent=5 // pred_check_branch
        %199 = sbr.rel (%p196) target = $region36
      $region35: #{tpu_custom_call.1} parent=5 // pred_region
        %s200 = ssub.s32 %s13, 1
        %p201 = scmp.lt.s32.totalorder %s22, 1
        %s202 = scalar_select %p201, %s22, 1
        %s203 = smul.addr %s202, 8
        %s204 = scalar_lea.vmem %s0, %s203
        %p205 = pneg %p51
        %p206 = pneg %p48
        %p207 = scmp.lt.s32.totalorder %s23, 3
        %s208 = scalar_select %p207, %s23, 3
        %s209 = smul.addr %s208, 4
        %s210 = smul.addr %s209, 4
        %s211 = scalar_lea.vmem %s1, %s210
        %p212 = pneg %p77
        %p213 = pneg %p74
        %p214 = scmp.lt.s32.totalorder %s23, 3
        %s215 = scalar_select %p214, %s23, 3
        %s216 = smul.addr %s215, 4
        %s217 = scalar_lea.vmem %s2, %s216
        %p218 = pneg %p103
        %p219 = pneg %p100
        %p220 = pneg %p124
        %p221 = pneg %p121
        %p222 = pneg %p150
        %p223 = pneg %p147
        %s224 = sand.u32 %s137, 1
        %s225 = scalar_lea.sflag [#allocation4], %s224
        %s226 = sand.u32 %s137, 1
        %s227 = smul.addr %s226, 8
        %s228 = scalar_lea.vmem [#allocation3], %s227
        %p229 = scmp.lt.s32.totalorder %s22, 1
        %s230 = scalar_select %p229, %s22, 1
        %s231 = smul.addr %s230, 8
        %s232 = scalar_lea.vmem %s0, %s231
        %p233 = scmp.lt.s32.totalorder %s23, 3
        %s234 = scalar_select %p233, %s23, 3
        %s235 = smul.addr %s234, 4
        %s236 = smul.addr %s235, 4
        %s237 = scalar_lea.vmem %s1, %s236
        %p238 = scmp.lt.s32.totalorder %s23, 3
        %s239 = scalar_select %p238, %s23, 3
        %s240 = smul.addr %s239, 4
        %s241 = scalar_lea.vmem %s2, %s240
        %p243 = scmp.eq.s32.totalorder %s23, 0
        // Predicated region
        $region37: #{tpu_custom_call.1} parent=35 // pred_check
          %p244 = pneg %p243
        $region38: #{tpu_custom_call.1} parent=35 // pred_check_branch
          %246 = sbr.rel (%p244) target = $region40
        $region39: #{tpu_custom_call.1} parent=35 // pred_region
          %vm247 = vcmask 261120
          %248 = vst.msk [vmem:[#allocation2] sm:$0xff] %vm247, 0.0
        $region40: #{tpu_custom_call.1} parent=35 // pred_fallthru
          _
        %v249 = vld [vmem:[%s232] sm:$0xff]
        %v250 = vpack.c.bf16 %v249, %v249
        %v251 = vld [vmem:[%s237] sm:$0xf]
        %v252 = vld [vmem:[%s237 + $0x4] sm:$0xf]
        %v253 = vld [vmem:[%s237 + $0x8] sm:$0xf]
        %v254 = vld [vmem:[%s237 + $0xc] sm:$0xf]
        %v259 = vunpack.c.l.b16 %v251
        %v260 = vunpack.c.l.b16 %v252
        %v261 = vunpack.c.l.b16 %v253
        %v262 = vunpack.c.l.b16 %v254
        %v263 = vpack.c.b16 %v260, %v259
        %v264 = vpack.c.b16 %v262, %v261
        %vm267 = vcmask 261120
        %v269 = vsel %vm267, %v250, 0
        %271 = vmatpush.bf16.msra.mxu0 0
        %272 = vmatpush.bf16.msra.mxu0 0
        %273 = vmatpush.bf16.msra.mxu0 0
        %274 = vmatpush.bf16.msra.mxu0 0
        %275 = vmatpush.bf16.msra.mxu0 0
        %276 = vmatpush.bf16.msra.mxu0 0
        %277 = vmatpush.bf16.msra.mxu0 %v264
        %278 = vmatpush.bf16.msra.mxu0 %v263
        %279 = vmatmul.bf16.gmra.mxu0 %v269
        %v280 = vpop.f32.mrf.mxu0
        %v281 = vadd.f32 0.0, %v280
        %v282 = vpop.f32.mrf.mxu0
        %283 = vdwg.mxu0
        %v284 = vpack.c.bf16 %v281, %v281
        %v286 = vunpack.c.l.b16 %v284
        %v287 = vpack.c.b16 %v286, %v286
        %288 = vrot.lane.b32.xlu0 %v287, 120
        %v289 = vpop.permute.xlu0 %288
        %vm290 = vcmask 64512
        %v292 = vsel %vm290, %v284, 0
        %v295 = vsel %vm290, %v289, 0
        %297 = vmatpush.bf16.xpose.msra.mxu0 0
        %298 = vmatpush.bf16.xpose.msra.mxu0 0
        %299 = vmatpush.bf16.xpose.msra.mxu0 0
        %300 = vmatpush.bf16.xpose.msra.mxu0 0
        %301 = vmatpush.bf16.xpose.msra.mxu0 0
        %302 = vmatpush.bf16.xpose.msra.mxu0 0
        %303 = vmatpush.bf16.xpose.msra.mxu0 0
        %304 = vmatpush.bf16.xpose.msra.mxu0 %v295
        %305 = vmatmul.bf16.gmra.mxu0 %v292
        %v306 = vpop.f32.mrf.mxu0
        %v307 = vadd.f32 0.0, %v306
        %v308 = vpop.f32.mrf.mxu0
        %309 = vdwg.mxu0
        %v310 = vsel %vm290, %v307, -inf
        %311 = vmax.xlane.f32.xlu0 %v310
        %v312 = vpop.xlane.xlu0 %311
        %v313 = vsub.f32 %v307, %v312
        %v314 = vmul.f32 %v313, 1.442695
        %v315 = vpow.pop %v314
        %v316 = vsel %vm290, %v315, 0.0
        %317 = vadd.xlane.f32.xlu0 %v316
        %v318 = vpop.xlane.xlu0 %317
        %v319 = vpack.c.bf16 %v315, %v315
        %320 = vrot.lane.b32.xlu0 %v287, 112
        %v321 = vpop.permute.xlu0 %320
        %v323 = vsel %vm290, %v319, 0
        %vm325 = vcmask 1043456
        %v327 = vsel %vm325, %v321, 0
        %329 = vmatpush.bf16.msra.mxu0 0
        %330 = vmatpush.bf16.msra.mxu0 0
        %331 = vmatpush.bf16.msra.mxu0 0
        %332 = vmatpush.bf16.msra.mxu0 0
        %333 = vmatpush.bf16.msra.mxu0 0
        %334 = vmatpush.bf16.msra.mxu0 0
        %335 = vmatpush.bf16.msra.mxu0 0
        %336 = vmatpush.bf16.msra.mxu0 %v327
        %337 = vmatmul.bf16.gmra.mxu0 %v323
        %v338 = vpop.f32.mrf.mxu0
        %v339 = vadd.f32 0.0, %v338
        %v340 = vpop.f32.mrf.mxu0
        %341 = vdwg.mxu0
        %v342 = vrcp.pop %v318
        %v343 = vmul.f32 %v318, %v342
        %v344 = vsub.f32 1.0, %v343
        %v345 = vmul.f32 %v342, %v344
        %v346 = vadd.f32 %v342, %v345
        %vm347 = vweird.f32 %v318
        %vm348 = vweird.f32 %v342
        %vm349 = vmor %vm347, %vm348
        %v350 = vsel %vm349, %v342, %v346
        %v351 = vand.u32 2147483647, %v318
        %vm352 = vcmp.eq.f32.partialorder %v351, 8.507059e+37
        %v353 = vand.u32 %v318, 2147483648
        %v354 = vor.u32 1.1754944e-38, %v353
        %v355 = vsel %vm352, %v354, %v350
        %v356 = vmul.f32 %v339, %v355
        %v357 = vld [vmem:[#allocation2] sm:$0xff]
        %v358 = vpack.c.bf16 %v356, %v356
        %v359 = vld [vmem:[%s241] sm:$0xf]
        %v361 = vsel %vm290, %v358, 0
        %v364 = vsel %vm325, %v359, 0
        %366 = vmatpush.bf16.msra.mxu0 0
        %367 = vmatpush.bf16.msra.mxu0 0
        %368 = vmatpush.bf16.msra.mxu0 0
        %369 = vmatpush.bf16.msra.mxu0 0
        %370 = vmatpush.bf16.msra.mxu0 0
        %371 = vmatpush.bf16.msra.mxu0 0
        %372 = vmatpush.bf16.msra.mxu0 0
        %373 = vmatpush.bf16.msra.mxu0 %v364
        %374 = vmatmul.bf16.gmra.mxu0 %v361
        %v375 = vpop.f32.mrf.mxu0
        %v376 = vadd.f32 0.0, %v375
        %v377 = vpop.f32.mrf.mxu0
        %378 = vdwg.mxu0
        %v379 = vadd.f32 %v357, %v376
        %380 = vst.msk [vmem:[#allocation2] sm:$0xff] %vm267, %v379
        %p381 = scmp.eq.s32.totalorder %s23, 3
        // Predicated region
        $region41: #{tpu_custom_call.1} parent=35 // pred_check
          %p382 = pneg %p381
        $region42: #{tpu_custom_call.1} parent=35 // pred_check_branch
          %384 = sbr.rel (%p382) target = $region44
        $region43: #{tpu_custom_call.1} parent=35 // pred_region
          %v385 = vld [vmem:[#allocation2] sm:$0xff]
          %v386 = vld [vmem:[%s3] sm:$0x1]
          %v388 = vperm.slane %v386, 0
          %v390 = vadd.f32 %v385, %v388
          %391 = vst.msk [vmem:[%s228] sm:$0xff] %vm267, %v390
        $region44: #{tpu_custom_call.1} parent=35 // pred_fallthru
          _
        %s392 = sand.u32 %s137, 1
        %s393 = scalar_lea.sflag [#allocation4], %s392
        %s394 = sand.u32 %s137, 1
        %s395 = smul.addr %s394, 8
        %s396 = scalar_lea.vmem [#allocation3], %s395
        // Predicated region
        $region45: #{tpu_custom_call.1} parent=35 // pred_check
          %p397 = pneg %p147
        $region46: #{tpu_custom_call.1} parent=35 // pred_check_branch
          %399 = sbr.rel (%p397) target = $region48
        $region47: #{tpu_custom_call.1} parent=35 // pred_region
          %401 = vsyncadd %s393, 0
          %s402 = smul.addr %s22, 8
          %s403 = scalar_lea.hbm %s4, %s402
          %s405 = sshll.u32 %s396, 4
          %s406 = int_to_ptr.vmem [resolvable:$true] %s405
          %s407 = sshll.u32 %s403, 4
          %s408 = int_to_ptr.hbm [resolvable:$true] %s407
          %410 = dma.vmem_to_hbm [thread:$0]  %s406, 128, %s408, %s393
        $region48: #{tpu_custom_call.1} parent=35 // pred_fallthru
          _
      $region36: #{tpu_custom_call.1} parent=5 // pred_fallthru
        _
      %p411 = scmp.le.s32.totalorder 2, %s13
      // Predicated region
      $region49: #{tpu_custom_call.1} parent=5 // pred_check
        %p412 = pneg %p411
      $region50: #{tpu_custom_call.1} parent=5 // pred_check_branch
        %414 = sbr.rel (%p412) target = $region52
      $region51: #{tpu_custom_call.1} parent=5 // pred_region
        %s415 = ssub.s32 %s13, 2
        // Predicated region
        $region53: #{tpu_custom_call.1} parent=51 // pred_check
          %p416 = pneg %p153
        $region54: #{tpu_custom_call.1} parent=51 // pred_check_branch
          %418 = sbr.rel (%p416) target = $region56
        $region55: #{tpu_custom_call.1} parent=51 // pred_region
          %s419 = sand.u32 %s138, 1
          %s420 = scalar_lea.sflag [#allocation4], %s419
          %s421 = sand.u32 %s138, 1
          %s422 = smul.addr %s421, 8
          %s423 = scalar_lea.vmem [#allocation3], %s422
          %425 = dma.done %s420, 128
        $region56: #{tpu_custom_call.1} parent=51 // pred_fallthru
          _
      $region52: #{tpu_custom_call.1} parent=5 // pred_fallthru
        _
    $region6: #{tpu_custom_call.1} parent=1 // loop_footer
      %s17 = sadd.s32 1, %s13
    $region7: #{tpu_custom_call.1} parent=1 // loop_footer_branch
      %12 = sbr.rel target = $region3
    $region8: #{tpu_custom_call.1} parent=1 // loop_exit
      _
    %426 = vsyncpa [#allocation4], 1
    %s427 = scalar_lea.sflag [#allocation4], 1
    %428 = vsyncpa %s427, 1

</llo_original>
